<compile_context>
chip_gen: v6e
topology: v6e:2x2x1
jax: 0.10.0
libtpu: 0.0.40
codegen_flags: <defaults>
</compile_context>

<pallas_src>
import jax
import jax.numpy as jnp
from jax.experimental import pallas as pl
from jax.experimental.pallas import tpu as pltpu

_LANE = 128  # TPU vreg lane width


def _sigmoid_kernel(x_ref, o_ref):
    # Elementwise sigmoid on the whole VMEM tile (exp on EUP, rest on VPU).
    o_ref[...] = jax.nn.sigmoid(x_ref[...])


@jax.jit
def sigmoid_pallas(x_nchw: jax.Array) -> jax.Array:
    """Applies elementwise sigmoid to an NCHW tensor via a Pallas TPU kernel."""
    orig_shape = x_nchw.shape
    total = x_nchw.size

    # Pack lane-dense: last dim exactly 128 so the tile fills full vregs.
    if total % _LANE == 0:
        x2d = x_nchw.reshape(total // _LANE, _LANE)
    else:
        x2d = x_nchw.reshape(1, total)

    out2d = pl.pallas_call(
        _sigmoid_kernel,
        out_shape=jax.ShapeDtypeStruct(x2d.shape, x2d.dtype),
        # Gridless whole-array kernel: minimal launch/pipeline overhead.
        in_specs=[pl.BlockSpec(memory_space=pltpu.MemorySpace.VMEM)],
        out_specs=pl.BlockSpec(memory_space=pltpu.MemorySpace.VMEM),
        # Output reuses the input buffer (pure elementwise, same shape/dtype).
        input_output_aliases={0: 0},
    )(x2d)

    return out2d.reshape(orig_shape)


if __name__ == "__main__":
    key = jax.random.PRNGKey(0)
    # Shape matches the module's expected input: [1, 768, 1, 1]
    x220 = jax.random.normal(key, (1, 768, 1, 1), dtype=jnp.float32)

    y = sigmoid_pallas(x220)
    y = jax.block_until_ready(y)

    # Sanity check against plain JAX reference.
    ref = jax.nn.sigmoid(x220)
    assert y.shape == (1, 768, 1, 1)
    assert jnp.allclose(y, ref, atol=1e-5, rtol=1e-5)

    print("KERNEL_OK")
</pallas_src>

<mosaic_0001>
module attributes {stable_mosaic.version = 11 : i64} {
  func.func @_sigmoid_kernel(%arg0: memref<6x128xf32, #tpu.memory_space<vmem>>, %arg1: memref<6x128xf32, #tpu.memory_space<vmem>>) attributes {dimension_semantics = [], scalar_prefetch = 0 : i64, scratch_operands = 0 : i64, tpu.core_type = #tpu.core_type<tc>} {
    %c0 = arith.constant 0 : index
    %c0_0 = arith.constant 0 : index
    %0 = vector.load %arg0[%c0, %c0_0] : memref<6x128xf32, #tpu.memory_space<vmem>>, vector<6x128xf32>
    %1 = arith.negf %0 : vector<6x128xf32>
    %2 = math.exp %1 : vector<6x128xf32>
    %cst = arith.constant 1.000000e+00 : f32
    %3 = vector.broadcast %cst : f32 to vector<6x128xf32>
    %4 = arith.addf %3, %2 : vector<6x128xf32>
    %5 = arith.divf %3, %4 : vector<6x128xf32>
    %c0_1 = arith.constant 0 : index
    %c0_2 = arith.constant 0 : index
    %6 = vector.load %arg1[%c0_1, %c0_2] : memref<6x128xf32, #tpu.memory_space<vmem>>, vector<6x128xf32>
    tpu.vector_store %arg1[%c0_1, %c0_2], %5 {strides = array<i32>} : memref<6x128xf32, #tpu.memory_space<vmem>>, vector<6x128xf32>,
    return
  }
}

</mosaic_0001>

<llo_original>
// kernel: sigmoid_pallas.1
$region0: #{sigmoid_pallas.1}
  #allocation0 [shape = 'u32[]', space=smem, size = 0x4, offset = 0x4, fixed_abs, tag = 'smem constant byte address 0x4 - core index']
  #allocation1 [shape = 'u32[144,128]{1,0:T(1,128)}', space=vmem, size = 0x12000, scoped, tag = 'internal scratch']
  %s0 = inlined_call_operand.vmem [shape: f32[6,128], index: 0, kind: input, shape index: {}, may-alias: {0,1}]
  %s1 = inlined_call_operand.vmem [shape: f32[6,128], index: 1, kind: output, shape index: {}, may-alias: {0,1}]
  %s2 = sld [smem:[#allocation0]]
  $region14: #{sigmoid_pallas.1} parent=0
    _
  %s4 = ssub.s32 1, %s2
  %s5 = scalar_select 0, %s4, %s2
  // Predicated region
  $region2: #{sigmoid_pallas.1} parent=0 // pred_check
    _
  $region3: #{sigmoid_pallas.1} parent=0 // pred_check_branch
    %7 = sbr.rel (0) target = $region5
  $region4: #{sigmoid_pallas.1} parent=0 // pred_region
    _
  $region5: #{sigmoid_pallas.1} parent=0 // pred_fallthru
    _
  %v8 = vld [vmem:[%s0] sm:$0x3f]
  %v9 = vxor.u32 %v8, 2147483648
  %v10 = vmul.f32 %v9, 1.442695
  %v11 = vpow.pop %v10
  %v12 = vadd.f32 %v11, 1.0
  %v13 = vrcp.pop %v12
  %v14 = vmul.f32 1.0, %v13
  %15 = vst [vmem:[%s1] sm:$0x3f] %v14
  // Predicated region
  $region6: #{sigmoid_pallas.1} parent=0 // pred_check
    _
  $region7: #{sigmoid_pallas.1} parent=0 // pred_check_branch
    %17 = sbr.rel (0) target = $region9
  $region8: #{sigmoid_pallas.1} parent=0 // pred_region
    _
  $region9: #{sigmoid_pallas.1} parent=0 // pred_fallthru
    _
  // Predicated region
  $region10: #{sigmoid_pallas.1} parent=0 // pred_check
    _
  $region11: #{sigmoid_pallas.1} parent=0 // pred_check_branch
    %19 = sbr.rel (0) target = $region13
  $region12: #{sigmoid_pallas.1} parent=0 // pred_region
    _
  $region13: #{sigmoid_pallas.1} parent=0 // pred_fallthru
    _

</llo_original>
